<compile_context>
chip_gen: v7x
topology: tpu7x:2x2x1
jax: 0.10.0
libtpu: 0.0.40
codegen_flags: <defaults>
</compile_context>

<pallas_src>
import functools

import jax
import jax.numpy as jnp
from jax.experimental import pallas as pl
from jax.experimental.pallas import tpu as pltpu


def _round_up(x, m):
    return (x + m - 1) // m * m


def tdnn_kernel(x_ref, w_ref, b_ref, o_ref, *, dilation, halo):
    # x_ref: (T_pad, D)        bf16, full replicate-padded time for this batch
    # w_ref: (K, D, OUT_pad)   bf16, resident weights (kernel-position major)
    # b_ref: (1, OUT_pad)      f32
    # o_ref: (tT, OUT_pad)     output time tile
    tT = o_ref.shape[0]
    K = w_ref.shape[0]
    j = pl.program_id(1)
    base = pl.multiple_of(j * tT, tT)          # 8-aligned dynamic window start

    # Load the halo window once (aligned dynamic start, static size).
    win = x_ref[pl.ds(base, tT + 2 * halo), :]  # (tT + 2*halo, D)

    acc = jnp.zeros(o_ref.shape, jnp.float32)
    for k in range(K):                          # K = 2*context+1 is tiny; static unroll
        xk = win[k * dilation:k * dilation + tT, :]            # (tT, D), static slice
        acc = acc + jnp.dot(xk, w_ref[k],
                            preferred_element_type=jnp.float32)
    acc = acc + b_ref[...]                      # broadcast (1, OUT_pad)
    o_ref[...] = jnp.maximum(acc, 0.0).astype(o_ref.dtype)


def tdnn_forward(x, w, b, *, context=1, dilation=1,
                 compute_dtype=jnp.bfloat16, time_tile=512):
    """x: (B, T, D); w: (K*D, out_size) (unfold order: kernel-pos major, feature
    minor, matching nn.Linear on the unfolded features); b: (out_size,).
    Returns (B, T, out_size) in x.dtype."""
    B, T, D = x.shape
    K = 2 * context + 1
    out_size = w.shape[1]
    halo = context * dilation

    # Time tiling (tiles multiple of 8 sublanes; T padded up to a whole tile).
    tT = min(_round_up(T, 8), _round_up(time_tile, 8))
    nT = pl.cdiv(T, tT)
    T_tiled = nT * tT

    # Replicate-pad time once: front halo + back halo + tile remainder.
    x_pad = jnp.pad(x, ((0, 0), (halo, halo + (T_tiled - T)), (0, 0)), mode="edge")
    T_pad = T_tiled + 2 * halo
    x_pad = x_pad.astype(compute_dtype)

    # Lane-dense output: pad out features to a multiple of 128 (sliced off below).
    OUT_pad = _round_up(out_size, 128)
    w3 = w.reshape(K, D, out_size)
    w3 = jnp.pad(w3, ((0, 0), (0, 0), (0, OUT_pad - out_size))).astype(compute_dtype)
    b2 = jnp.pad(b, (0, OUT_pad - out_size)).reshape(1, OUT_pad).astype(jnp.float32)

    out_dtype = x.dtype
    kernel = functools.partial(tdnn_kernel, dilation=dilation, halo=halo)

    # VMEM budget (double-buffered input/output blocks + resident weights) w/ headroom;
    # capped at 64 MiB so the same setting is safe on v7x (64 MiB physical VMEM).
    isz = jnp.dtype(compute_dtype).itemsize
    osz = jnp.dtype(out_dtype).itemsize
    needed = (2 * T_pad * D * isz + 2 * tT * OUT_pad * osz
              + 2 * K * D * OUT_pad * isz + 2 * OUT_pad * 4)
    vmem_limit = int(min(max(needed * 2, 32 * 1024 * 1024), 64 * 1024 * 1024))

    cost = pl.CostEstimate(
        flops=2 * B * T_tiled * K * D * OUT_pad,
        transcendentals=0,
        bytes_accessed=(B * T_pad * D * isz + K * D * OUT_pad * isz
                        + OUT_pad * 4 + B * T_tiled * OUT_pad * osz),
    )

    out = pl.pallas_call(
        kernel,
        out_shape=jax.ShapeDtypeStruct((B, T_tiled, OUT_pad), out_dtype),
        grid_spec=pltpu.PrefetchScalarGridSpec(
            num_scalar_prefetch=0,
            grid=(B, nT),
            in_specs=[
                # Full padded time per batch; constant index along the time-tile
                # axis => DMA'd once per batch, resident across time tiles.
                pl.BlockSpec((pl.Squeezed(), T_pad, D), lambda bb, jj: (bb, 0, 0)),
                # Resident weights / bias (constant index maps => no re-DMA).
                pl.BlockSpec((K, D, OUT_pad), lambda bb, jj: (0, 0, 0)),
                pl.BlockSpec((1, OUT_pad), lambda bb, jj: (0, 0)),
            ],
            out_specs=pl.BlockSpec((pl.Squeezed(), tT, OUT_pad),
                                   lambda bb, jj: (bb, jj, 0)),
        ),
        compiler_params=pltpu.CompilerParams(
            dimension_semantics=("parallel", "parallel"),
            vmem_limit_bytes=vmem_limit,
        ),
        cost_estimate=cost,
    )(x_pad, w3, b2)

    return out[:, :T, :out_size]


def tdnn_reference(x, w, b, *, context=1, dilation=1):
    """Pure-JAX reference: clip-based gather == replicate pad + unfold, then Linear+ReLU."""
    B, T, D = x.shape
    K = 2 * context + 1
    offsets = jnp.arange(-context * dilation, context * dilation + 1, dilation)
    idx = jnp.clip(jnp.arange(T)[:, None] + offsets[None, :], 0, T - 1)
    x_ctx = x[:, idx, :].reshape(B, T, K * D)
    return jnp.maximum(x_ctx @ w + b, 0.0)


if __name__ == "__main__":
    # Small shapes consistent with the module's forward: x is (B, T, D).
    B, T, D = 2, 16, 8
    context, dilation = 1, 1
    K = 2 * context + 1
    in_feat = K * D
    out_size = 32

    key = jax.random.PRNGKey(0)
    kx, kw, kb = jax.random.split(key, 3)

    x = jax.random.normal(kx, (B, T, D), dtype=jnp.float32)

    # Deterministic parameter init (mimic nn.Linear uniform init bounds).
    bound = 1.0 / jnp.sqrt(jnp.float32(in_feat))
    w = jax.random.uniform(kw, (in_feat, out_size), jnp.float32, -bound, bound)
    b = jax.random.uniform(kb, (out_size,), jnp.float32, -bound, bound)

    out = tdnn_forward(x, w, b, context=context, dilation=dilation)
    out = jax.block_until_ready(out)
    assert out.shape == (B, T, out_size)

    # Reference with the same bf16 input/weight casting (f32 accumulation).
    x_bf = x.astype(jnp.bfloat16).astype(jnp.float32)
    w_bf = w.astype(jnp.bfloat16).astype(jnp.float32)
    ref = tdnn_reference(x_bf, w_bf, b, context=context, dilation=dilation)
    assert jnp.allclose(out, ref, atol=1e-3, rtol=1e-3)

    print("KERNEL_OK")
</pallas_src>

<mosaic_0001>
module attributes {stable_mosaic.version = 11 : i64} {
  func.func @tdnn_kernel(%arg0: i32, %arg1: i32, %arg2: memref<1x18x8xbf16, #tpu.memory_space<vmem>>, %arg3: memref<3x8x128xbf16, #tpu.memory_space<vmem>>, %arg4: memref<1x128xf32, #tpu.memory_space<vmem>>, %arg5: memref<1x16x128xf32, #tpu.memory_space<vmem>>) attributes {dimension_semantics = [#tpu.dimension_semantics<parallel>, #tpu.dimension_semantics<parallel>], iteration_bounds = array<i64: 2, 1>, scalar_prefetch = 0 : i64, scratch_operands = 0 : i64, tpu.core_type = #tpu.core_type<tc>, window_params = [{transform_indices = @transform_0, window_bounds = array<i64: 1, 18, 8>}, {pipeline_mode = #tpu.pipeline_mode<synchronous>, transform_indices = @transform_1, window_bounds = array<i64: 3, 8, 128>}, {pipeline_mode = #tpu.pipeline_mode<synchronous>, transform_indices = @transform_2, window_bounds = array<i64: 1, 128>}, {transform_indices = @transform_3, window_bounds = array<i64: 1, 16, 128>}]} {
    %c16_i32 = arith.constant 16 : i32
    %0 = arith.muli %arg1, %c16_i32 : i32
    %1 = tpu.assume_multiple %0, 16 : i32
    %c0 = arith.constant 0 : index
    %2 = arith.index_cast %1 : i32 to index
    %c0_0 = arith.constant 0 : index
    %3 = vector.load %arg2[%c0, %2, %c0_0] : memref<1x18x8xbf16, #tpu.memory_space<vmem>>, vector<1x18x8xbf16>
    %4 = vector.shape_cast %3 : vector<1x18x8xbf16> to vector<18x8xbf16>
    %cst = arith.constant 0.000000e+00 : f32
    %5 = vector.broadcast %cst : f32 to vector<16x128xf32>
    %6 = vector.extract_strided_slice %4 {offsets = [0, 0], sizes = [16, 8], strides = [1, 1]} : vector<18x8xbf16> to vector<16x8xbf16>
    %c0_1 = arith.constant 0 : index
    %c0_2 = arith.constant 0 : index
    %c0_3 = arith.constant 0 : index
    %7 = vector.load %arg3[%c0_1, %c0_2, %c0_3] : memref<3x8x128xbf16, #tpu.memory_space<vmem>>, vector<1x8x128xbf16>
    %8 = vector.shape_cast %7 : vector<1x8x128xbf16> to vector<8x128xbf16>
    %cst_4 = arith.constant dense<0.000000e+00> : vector<16x128xf32>
    %9 = tpu.matmul %6, %8, %cst_4 {dimension_numbers = #tpu.dot_dimension_numbers<[1], [0], [0], [1], [0, 0, 1, 1], [], []>} : vector<16x8xbf16>, vector<8x128xbf16>, vector<16x128xf32> -> vector<16x128xf32>
    %10 = arith.addf %5, %9 : vector<16x128xf32>
    %11 = vector.extract_strided_slice %4 {offsets = [1, 0], sizes = [16, 8], strides = [1, 1]} : vector<18x8xbf16> to vector<16x8xbf16>
    %c1 = arith.constant 1 : index
    %c0_5 = arith.constant 0 : index
    %c0_6 = arith.constant 0 : index
    %12 = vector.load %arg3[%c1, %c0_5, %c0_6] : memref<3x8x128xbf16, #tpu.memory_space<vmem>>, vector<1x8x128xbf16>
    %13 = vector.shape_cast %12 : vector<1x8x128xbf16> to vector<8x128xbf16>
    %cst_7 = arith.constant dense<0.000000e+00> : vector<16x128xf32>
    %14 = tpu.matmul %11, %13, %cst_7 {dimension_numbers = #tpu.dot_dimension_numbers<[1], [0], [0], [1], [0, 0, 1, 1], [], []>} : vector<16x8xbf16>, vector<8x128xbf16>, vector<16x128xf32> -> vector<16x128xf32>
    %15 = arith.addf %10, %14 : vector<16x128xf32>
    %16 = vector.extract_strided_slice %4 {offsets = [2, 0], sizes = [16, 8], strides = [1, 1]} : vector<18x8xbf16> to vector<16x8xbf16>
    %c2 = arith.constant 2 : index
    %c0_8 = arith.constant 0 : index
    %c0_9 = arith.constant 0 : index
    %17 = vector.load %arg3[%c2, %c0_8, %c0_9] : memref<3x8x128xbf16, #tpu.memory_space<vmem>>, vector<1x8x128xbf16>
    %18 = vector.shape_cast %17 : vector<1x8x128xbf16> to vector<8x128xbf16>
    %cst_10 = arith.constant dense<0.000000e+00> : vector<16x128xf32>
    %19 = tpu.matmul %16, %18, %cst_10 {dimension_numbers = #tpu.dot_dimension_numbers<[1], [0], [0], [1], [0, 0, 1, 1], [], []>} : vector<16x8xbf16>, vector<8x128xbf16>, vector<16x128xf32> -> vector<16x128xf32>
    %20 = arith.addf %15, %19 : vector<16x128xf32>
    %c0_11 = arith.constant 0 : index
    %c0_12 = arith.constant 0 : index
    %21 = vector.load %arg4[%c0_11, %c0_12] : memref<1x128xf32, #tpu.memory_space<vmem>>, vector<1x128xf32>
    %22 = vector.broadcast %21 : vector<1x128xf32> to vector<16x128xf32>
    %23 = arith.addf %20, %22 : vector<16x128xf32>
    %cst_13 = arith.constant 0.000000e+00 : f32
    %24 = vector.broadcast %cst_13 : f32 to vector<16x128xf32>
    %25 = arith.maximumf %23, %24 : vector<16x128xf32>
    %c0_14 = arith.constant 0 : index
    %c0_15 = arith.constant 0 : index
    %c0_16 = arith.constant 0 : index
    %26 = vector.load %arg5[%c0_14, %c0_15, %c0_16] : memref<1x16x128xf32, #tpu.memory_space<vmem>>, vector<1x16x128xf32>
    %27 = vector.shape_cast %26 : vector<1x16x128xf32> to vector<16x128xf32>
    %28 = vector.shape_cast %25 : vector<16x128xf32> to vector<1x16x128xf32>
    tpu.vector_store %arg5[%c0_14, %c0_15, %c0_16], %28 {strides = array<i32>} : memref<1x16x128xf32, #tpu.memory_space<vmem>>, vector<1x16x128xf32>,
    return
  }
  func.func @transform_0(%arg0: i32, %arg1: i32) -> (i32, i32, i32) {
    %c0_i32 = arith.constant 0 : i32
    %c0_i32_0 = arith.constant 0 : i32
    %c0_i32_1 = arith.constant 0 : i32
    return %arg0, %c0_i32, %c0_i32_0 : i32, i32, i32
  }
  func.func @transform_1(%arg0: i32, %arg1: i32) -> (i32, i32, i32) {
    %c0_i32 = arith.constant 0 : i32
    %c0_i32_0 = arith.constant 0 : i32
    %c0_i32_1 = arith.constant 0 : i32
    %c0_i32_2 = arith.constant 0 : i32
    return %c0_i32, %c0_i32_0, %c0_i32_1 : i32, i32, i32
  }
  func.func @transform_2(%arg0: i32, %arg1: i32) -> (i32, i32) {
    %c0_i32 = arith.constant 0 : i32
    %c0_i32_0 = arith.constant 0 : i32
    %c0_i32_1 = arith.constant 0 : i32
    return %c0_i32, %c0_i32_0 : i32, i32
  }
  func.func @transform_3(%arg0: i32, %arg1: i32) -> (i32, i32, i32) {
    %c0_i32 = arith.constant 0 : i32
    %c0_i32_0 = arith.constant 0 : i32
    return %arg0, %arg1, %c0_i32 : i32, i32, i32
  }
}

</mosaic_0001>

<llo_original>
// kernel: tpu_custom_call.1
$region0: #{tpu_custom_call.1}
  #allocation0 [shape = 'u32[]', space=smem, size = 0x4, offset = 0x4, fixed_abs, tag = 'smem constant byte address 0x4 - core index']
  #allocation1 [shape = 'u32[144,128]{1,0:T(1,128)}', space=vmem, size = 0x12000, scoped, tag = 'internal scratch']
  %s0 = inlined_call_operand.vmem [shape: bf16[2,18,8], index: 0, kind: input, shape index: {}]
  %s1 = inlined_call_operand.vmem [shape: bf16[3,8,128], index: 1, kind: input, shape index: {}]
  %s2 = inlined_call_operand.vmem [shape: f32[1,128], index: 2, kind: input, shape index: {}]
  %s3 = inlined_call_operand.hbm [shape: f32[2,16,128], index: 3, kind: output, shape index: {}]
  %s4 = sld [smem:[#allocation0]]
  $region45: #{tpu_custom_call.1} parent=0
    _
  %s6 = ssub.s32 1, %s4
  %s7 = scalar_select 0, %s6, %s4
  $region1: #{tpu_custom_call.1} parent=0
    #allocation2 [shape = 'u8[16384]{0}', space=vmem, size = 0x4000, scoped, tag = 'output window, operand 0']
    #allocation3 [shape = 's32[2]{0}', space=sflag, size = 0x8, scoped, tag = 'scoped memory for tpu_custom_call.1']
    %8 = vsyncpa [#allocation3], 0
    %s9 = scalar_lea.sflag [#allocation3], 1
    %10 = vsyncpa %s9, 0
    loop: start=0, step=1, limit=4
    $region2: #{tpu_custom_call.1} parent=1 // loop_pre_header
      _
    $region3: #{tpu_custom_call.1} parent=1 // loop_header
      %s12 = sphi 0, %s16
      %p13 = scmp.ge.s32.totalorder %s12, 4
      %s19 = sphi 0, %s31
      %s20 = sphi 0, %s27
      %s21 = sphi 0, %s19
      %s22 = sphi 0, %s20
      %s23 = sphi 0, %s21
      %s24 = sphi 0, %s22
      %s34 = sphi 0, %s36
      %s37 = sphi 0, %s34
      %s38 = sphi 0, %s37
      %s54 = sphi 0, %s38
      %s58 = sphi 0, %s58
      %s60 = sphi 0, %s58
      %s61 = sphi 0, %s60
      %s75 = sphi 0, %s61
      %s79 = sphi 0, %s79
      %s81 = sphi 0, %s79
      %s82 = sphi 0, %s81
      %s96 = sphi 0, %s82
      %s104 = sphi 0, %s106
      %s107 = sphi 0, %s104
      %s108 = sphi 0, %s107
      %s124 = sphi 0, %s108
    $region4: #{tpu_custom_call.1} parent=1 // loop_header_branch
      %15 = sbr.rel (%p13) target = $region8
    $region5: #{tpu_custom_call.1} parent=1 // loop_body
      %s17 = ssub.s32 %s12, 1
      %s18 = ssub.s32 %s12, 2
      %s25 = sadd.s32 1, %s20
      %p26 = scmp.ge.s32.totalorder %s25, 1
      %s27 = scalar_select %p26, 0, %s25
      %s28 = sadd.s32 1, %s19
      %s29 = scalar_select %p26, %s28, %s19
      %p30 = scmp.ge.s32.totalorder %s29, 2
      %s31 = scalar_select %p30, 0, %s29
      %s32 = ssub.s32 %s19, %s31
      %p33 = scmp.eq.s32.totalorder %s32, 0
      %s35 = sadd.s32 %s34, 1
      %s36 = scalar_select %p33, %s34, %s35
      %p39 = pneg %p33
      %p40 = scmp.eq.s32.totalorder %s12, 1
      %p41 = por %p39, %p40
      %p42 = scmp.ne.s32.totalorder %s34, %s37
      %p43 = scmp.eq.s32.totalorder %s12, 0
      %p44 = por %p42, %p43
      %p45 = scmp.ne.s32.totalorder %s34, %s37
      %p46 = scmp.eq.s32.totalorder %s17, 1
      %p47 = por %p45, %p46
      %p48 = scmp.ne.s32.totalorder %s37, %s38
      %p49 = scmp.eq.s32.totalorder %s17, 0
      %p50 = por %p48, %p49
      %p51 = scmp.ne.s32.totalorder %s37, %s38
      %p52 = scmp.eq.s32.totalorder %s18, 1
      %p53 = por %p51, %p52
      %p55 = scmp.ne.s32.totalorder %s38, %s54
      %p56 = scmp.eq.s32.totalorder %s18, 0
      %p57 = por %p55, %p56
      %s59 = sadd.s32 %s58, 1
      %p62 = scmp.eq.s32.totalorder %s12, 1
      %p63 = scmp.ne.s32.totalorder %s58, %s60
      %p64 = scmp.eq.s32.totalorder %s12, 0
      %p65 = por %p63, %p64
      %p66 = scmp.ne.s32.totalorder %s58, %s60
      %p67 = scmp.eq.s32.totalorder %s17, 1
      %p68 = por %p66, %p67
      %p69 = scmp.ne.s32.totalorder %s60, %s61
      %p70 = scmp.eq.s32.totalorder %s17, 0
      %p71 = por %p69, %p70
      %p72 = scmp.ne.s32.totalorder %s60, %s61
      %p73 = scmp.eq.s32.totalorder %s18, 1
      %p74 = por %p72, %p73
      %p76 = scmp.ne.s32.totalorder %s61, %s75
      %p77 = scmp.eq.s32.totalorder %s18, 0
      %p78 = por %p76, %p77
      %s80 = sadd.s32 %s79, 1
      %p83 = scmp.eq.s32.totalorder %s12, 1
      %p84 = scmp.ne.s32.totalorder %s79, %s81
      %p85 = scmp.eq.s32.totalorder %s12, 0
      %p86 = por %p84, %p85
      %p87 = scmp.ne.s32.totalorder %s79, %s81
      %p88 = scmp.eq.s32.totalorder %s17, 1
      %p89 = por %p87, %p88
      %p90 = scmp.ne.s32.totalorder %s81, %s82
      %p91 = scmp.eq.s32.totalorder %s17, 0
      %p92 = por %p90, %p91
      %p93 = scmp.ne.s32.totalorder %s81, %s82
      %p94 = scmp.eq.s32.totalorder %s18, 1
      %p95 = por %p93, %p94
      %p97 = scmp.ne.s32.totalorder %s82, %s96
      %p98 = scmp.eq.s32.totalorder %s18, 0
      %p99 = por %p97, %p98
      %s100 = ssub.s32 %s19, %s31
      %s101 = ssub.s32 %s20, %s27
      %s102 = sor.u32 %s100, %s101
      %p103 = scmp.eq.s32.totalorder %s102, 0
      %s105 = sadd.s32 %s104, 1
      %s106 = scalar_select %p103, %s104, %s105
      %p109 = pneg %p103
      %p110 = scmp.eq.s32.totalorder %s12, 1
      %p111 = por %p109, %p110
      %p112 = scmp.ne.s32.totalorder %s104, %s107
      %p113 = scmp.eq.s32.totalorder %s12, 0
      %p114 = por %p112, %p113
      %p115 = scmp.ne.s32.totalorder %s104, %s107
      %p116 = scmp.eq.s32.totalorder %s17, 1
      %p117 = por %p115, %p116
      %p118 = scmp.ne.s32.totalorder %s107, %s108
      %p119 = scmp.eq.s32.totalorder %s17, 0
      %p120 = por %p118, %p119
      %p121 = scmp.ne.s32.totalorder %s107, %s108
      %p122 = scmp.eq.s32.totalorder %s18, 1
      %p123 = por %p121, %p122
      %p125 = scmp.ne.s32.totalorder %s108, %s124
      %p126 = scmp.eq.s32.totalorder %s18, 0
      %p127 = por %p125, %p126
      %p128 = scmp.le.s32.totalorder 1, %s12
      %p129 = scmp.lt.s32.totalorder %s12, 3
      %p130 = pnand %p128, %p129
      %p131 = pneg %p130
      // Predicated region
      $region9: #{tpu_custom_call.1} parent=5 // pred_check
        _
      $region10: #{tpu_custom_call.1} parent=5 // pred_check_branch
        %133 = sbr.rel (%p130) target = $region12
      $region11: #{tpu_custom_call.1} parent=5 // pred_region
        %s134 = ssub.s32 %s12, 1
        // Predicated region
        $region13: #{tpu_custom_call.1} parent=11 // pred_check
          %p135 = pneg %p71
        $region14: #{tpu_custom_call.1} parent=11 // pred_check_branch
          %137 = sbr.rel (%p135) target = $region16
        $region15: #{tpu_custom_call.1} parent=11 // pred_region
          _
        $region16: #{tpu_custom_call.1} parent=11 // pred_fallthru
          _
        // Predicated region
        $region17: #{tpu_custom_call.1} parent=11 // pred_check
          %p138 = pneg %p92
        $region18: #{tpu_custom_call.1} parent=11 // pred_check_branch
          %140 = sbr.rel (%p138) target = $region20
        $region19: #{tpu_custom_call.1} parent=11 // pred_region
          _
        $region20: #{tpu_custom_call.1} parent=11 // pred_fallthru
          _
      $region12: #{tpu_custom_call.1} parent=5 // pred_fallthru
        _
      %p141 = scmp.lt.s32.totalorder %s12, 2
      // Predicated region
      $region21: #{tpu_custom_call.1} parent=5 // pred_check
        %p142 = pneg %p141
      $region22: #{tpu_custom_call.1} parent=5 // pred_check_branch
        %144 = sbr.rel (%p142) target = $region24
      $region23: #{tpu_custom_call.1} parent=5 // pred_region
        // Predicated region
        $region25: #{tpu_custom_call.1} parent=23 // pred_check
          %p145 = pneg %p44
        $region26: #{tpu_custom_call.1} parent=23 // pred_check_branch
          %147 = sbr.rel (%p145) target = $region28
        $region27: #{tpu_custom_call.1} parent=23 // pred_region
          %p148 = scmp.lt.s32.totalorder %s19, 1
          %s149 = scalar_select %p148, %s19, 1
          %s150 = smul.addr %s149, 3
          %s151 = smul.addr %s150, 4
          %s152 = scalar_lea.vmem %s0, %s151
        $region28: #{tpu_custom_call.1} parent=23 // pred_fallthru
          _
      $region24: #{tpu_custom_call.1} parent=5 // pred_fallthru
        _
      %p153 = scmp.le.s32.totalorder 1, %s12
      %p154 = scmp.lt.s32.totalorder %s12, 3
      %p155 = pnand %p153, %p154
      %p156 = pneg %p155
      // Predicated region
      $region29: #{tpu_custom_call.1} parent=5 // pred_check
        _
      $region30: #{tpu_custom_call.1} parent=5 // pred_check_branch
        %158 = sbr.rel (%p155) target = $region32
      $region31: #{tpu_custom_call.1} parent=5 // pred_region
        %s159 = ssub.s32 %s12, 1
        %p160 = scmp.lt.s32.totalorder %s21, 1
        %s161 = scalar_select %p160, %s21, 1
        %s162 = smul.addr %s161, 3
        %s163 = smul.addr %s162, 4
        %s164 = scalar_lea.vmem %s0, %s163
        %p165 = pneg %p50
        %p166 = pneg %p47
        %p167 = pneg %p71
        %p168 = pneg %p68
        %p169 = pneg %p92
        %p170 = pneg %p89
        %p171 = pneg %p120
        %p172 = pneg %p117
        %s173 = sand.u32 %s107, 1
        %s174 = scalar_lea.sflag [#allocation3], %s173
        %s175 = sand.u32 %s107, 1
        %s176 = smul.addr %s175, 16
        %s177 = scalar_lea.vmem [#allocation2], %s176
        %p178 = scmp.lt.s32.totalorder %s21, 1
        %s179 = scalar_select %p178, %s21, 1
        %s180 = smul.addr %s179, 3
        %s181 = smul.addr %s180, 4
        %s182 = scalar_lea.vmem %s0, %s181
        %s183 = smul.u32 2, %s22
        %s185 = smul.u32 %s22, 16
        %s186 = sshra.s32 %s185, 3
        %s187 = sand.u32 %s185, 7
        %s188 = smul.addr %s186, 4
        %s189 = scalar_lea.vmem %s182, %s188
        %v190 = vld [vmem:[%s189] sm:$0xf]
        %v191 = vld [vmem:[%s189 + $0x4] sm:$0xf]
        %v192 = vld [vmem:[%s189 + $0x8] sm:$0x1]
        %v193 = vld [vmem:[%s1] sm:$0xf]
        %s194 = scalar_lea.vmem %s1, 4
        %v195 = vld [vmem:[%s194] sm:$0xf]
        %v199 = vunpack.c.l.b16 %v190
        %v200 = vunpack.c.l.b16 %v191
        %v201 = vunpack.c.l.b16 %v192
        %v202 = vpack.c.b16 %v200, %v199
        %v203 = vpack.c.b16 %v201, %v201
        %vm204 = vsmask.f32 7424
        %v206 = vshrl.u32 %v202, 16
        %v208 = vshll.u32 %v202, 16
        %v210 = vrot.slane %v208, 1
        %v211 = vor.u32 %v206, %v210
        %v213 = vshll.u32 %v203, 16
        %v215 = vrot.slane %v213, 1
        %v216 = vsel %vm204, %v211, %v215
        %vm217 = vcmask 64512
        %v219 = vsel %vm217, %v216, 0
        %vm221 = vcmask 1043456
        %v223 = vsel %vm221, %v195, 0
        %225 = vmatprep.subr.bf16.mxu0 0
        %226 = vmatpush1.bf16.msra.mxu0 %v223
        %227 = vmatprep.subr.bf16.mxu0 0
        %228 = vmatpush1.bf16.msra.mxu0 0
        %229 = vmatprep.subr.bf16.mxu0 0
        %230 = vmatpush1.bf16.msra.mxu0 0
        %231 = vmatprep.subr.bf16.mxu0 0
        %232 = vmatpush1.bf16.msra.mxu0 0
        %233 = vmatprep.subr.bf16.mxu0 0
        %234 = vmatpush1.bf16.msra.mxu0 0
        %235 = vmatprep.subr.bf16.mxu0 0
        %236 = vmatpush1.bf16.msra.mxu0 0
        %237 = vmatprep.subr.bf16.mxu0 0
        %238 = vmatpush1.bf16.msra.mxu0 0
        %239 = vmatprep.subr.bf16.mxu0 0
        %240 = vmatpush1.bf16.msra.mxu0 0
        %241 = vmatprep.subr.bf16.mxu0 0
        %242 = vmatpush1.bf16.msra.mxu0 0
        %243 = vmatprep.subr.bf16.mxu0 0
        %244 = vmatpush1.bf16.msra.mxu0 0
        %245 = vmatprep.subr.bf16.mxu0 0
        %246 = vmatpush1.bf16.msra.mxu0 0
        %247 = vmatprep.subr.bf16.mxu0 0
        %248 = vmatpush1.bf16.msra.mxu0 0
        %249 = vmatprep.subr.bf16.mxu0 0
        %250 = vmatpush1.bf16.msra.mxu0 0
        %251 = vmatprep.subr.bf16.mxu0 0
        %252 = vmatpush1.bf16.msra.mxu0 0
        %253 = vmatprep.subr.bf16.mxu0 0
        %254 = vmatpush1.bf16.msra.mxu0 0
        %255 = vmatprep.subr.bf16.mxu0 0
        %256 = vmatpush1.bf16.msra.mxu0 0
        %257 = vmatprep.mubr.bf16.mxu0 0
        %258 = vmatmul.mubr.bf16.gmra.mrb[0].mxu0 %v219
        %v259 = vpop.f32.mrb[0].mxu0
        %v260 = vadd.f32 0.0, %v259
        %v261 = vpop.f32.mrb[0].mxu0
        %v262 = vpop.f32.mrb[0].mxu0
        %v263 = vadd.f32 0.0, %v262
        %v264 = vpop.f32.mrb[0].mxu0
        %265 = vdwg.mxu0
        %v266 = vsel %vm217, %v202, 0
        %v269 = vsel %vm221, %v193, 0
        %271 = vmatprep.subr.bf16.mxu0 0
        %272 = vmatpush1.bf16.msra.mxu0 %v269
        %273 = vmatprep.subr.bf16.mxu0 0
        %274 = vmatpush1.bf16.msra.mxu0 0
        %275 = vmatprep.subr.bf16.mxu0 0
        %276 = vmatpush1.bf16.msra.mxu0 0
        %277 = vmatprep.subr.bf16.mxu0 0
        %278 = vmatpush1.bf16.msra.mxu0 0
        %279 = vmatprep.subr.bf16.mxu0 0
        %280 = vmatpush1.bf16.msra.mxu0 0
        %281 = vmatprep.subr.bf16.mxu0 0
        %282 = vmatpush1.bf16.msra.mxu0 0
        %283 = vmatprep.subr.bf16.mxu0 0
        %284 = vmatpush1.bf16.msra.mxu0 0
        %285 = vmatprep.subr.bf16.mxu0 0
        %286 = vmatpush1.bf16.msra.mxu0 0
        %287 = vmatprep.subr.bf16.mxu0 0
        %288 = vmatpush1.bf16.msra.mxu0 0
        %289 = vmatprep.subr.bf16.mxu0 0
        %290 = vmatpush1.bf16.msra.mxu0 0
        %291 = vmatprep.subr.bf16.mxu0 0
        %292 = vmatpush1.bf16.msra.mxu0 0
        %293 = vmatprep.subr.bf16.mxu0 0
        %294 = vmatpush1.bf16.msra.mxu0 0
        %295 = vmatprep.subr.bf16.mxu0 0
        %296 = vmatpush1.bf16.msra.mxu0 0
        %297 = vmatprep.subr.bf16.mxu0 0
        %298 = vmatpush1.bf16.msra.mxu0 0
        %299 = vmatprep.subr.bf16.mxu0 0
        %300 = vmatpush1.bf16.msra.mxu0 0
        %301 = vmatprep.subr.bf16.mxu0 0
        %302 = vmatpush1.bf16.msra.mxu0 0
        %303 = vmatprep.mubr.bf16.mxu0 0
        %304 = vmatmul.mubr.bf16.gmra.mrb[0].mxu0 %v266
        %v305 = vpop.f32.mrb[0].mxu0
        %v306 = vadd.f32 %v260, %v305
        %v307 = vpop.f32.mrb[0].mxu0
        %v308 = vpop.f32.mrb[0].mxu0
        %v309 = vadd.f32 %v263, %v308
        %v310 = vpop.f32.mrb[0].mxu0
        %311 = vdwg.mxu0
        %s312 = scalar_lea.vmem %s1, 8
        %v313 = vld [vmem:[%s312] sm:$0xf]
        %vm314 = vcmask 1046528
        %v315 = vrot.slane %v202, 1
        %v316 = vrot.slane %v203, 1
        %v317 = vsel %vm314, %v315, %v316
        %v319 = vsel %vm217, %v317, 0
        %v322 = vsel %vm221, %v313, 0
        %324 = vmatprep.subr.bf16.mxu0 0
        %325 = vmatpush1.bf16.msra.mxu0 %v322
        %326 = vmatprep.subr.bf16.mxu0 0
        %327 = vmatpush1.bf16.msra.mxu0 0
        %328 = vmatprep.subr.bf16.mxu0 0
        %329 = vmatpush1.bf16.msra.mxu0 0
        %330 = vmatprep.subr.bf16.mxu0 0
        %331 = vmatpush1.bf16.msra.mxu0 0
        %332 = vmatprep.subr.bf16.mxu0 0
        %333 = vmatpush1.bf16.msra.mxu0 0
        %334 = vmatprep.subr.bf16.mxu0 0
        %335 = vmatpush1.bf16.msra.mxu0 0
        %336 = vmatprep.subr.bf16.mxu0 0
        %337 = vmatpush1.bf16.msra.mxu0 0
        %338 = vmatprep.subr.bf16.mxu0 0
        %339 = vmatpush1.bf16.msra.mxu0 0
        %340 = vmatprep.subr.bf16.mxu0 0
        %341 = vmatpush1.bf16.msra.mxu0 0
        %342 = vmatprep.subr.bf16.mxu0 0
        %343 = vmatpush1.bf16.msra.mxu0 0
        %344 = vmatprep.subr.bf16.mxu0 0
        %345 = vmatpush1.bf16.msra.mxu0 0
        %346 = vmatprep.subr.bf16.mxu0 0
        %347 = vmatpush1.bf16.msra.mxu0 0
        %348 = vmatprep.subr.bf16.mxu0 0
        %349 = vmatpush1.bf16.msra.mxu0 0
        %350 = vmatprep.subr.bf16.mxu0 0
        %351 = vmatpush1.bf16.msra.mxu0 0
        %352 = vmatprep.subr.bf16.mxu0 0
        %353 = vmatpush1.bf16.msra.mxu0 0
        %354 = vmatprep.subr.bf16.mxu0 0
        %355 = vmatpush1.bf16.msra.mxu0 0
        %356 = vmatprep.mubr.bf16.mxu0 0
        %357 = vmatmul.mubr.bf16.gmra.mrb[0].mxu0 %v319
        %v358 = vpop.f32.mrb[0].mxu0
        %v359 = vadd.f32 0.0, %v358
        %v360 = vpop.f32.mrb[0].mxu0
        %v361 = vpop.f32.mrb[0].mxu0
        %v362 = vadd.f32 0.0, %v361
        %v363 = vpop.f32.mrb[0].mxu0
        %364 = vdwg.mxu0
        %v365 = vadd.f32 %v306, %v359
        %v366 = vadd.f32 %v309, %v362
        %v367 = vld [vmem:[%s2] sm:$0x1]
        %v369 = vlaneseq
        %v370 = vshrl.u32 %v369, 7
        %v371 = vsub.s32 0, %v370
        %v372 = vrot.slane %v367, %v371
        %v374 = vadd.f32 %v365, %v372
        %v375 = vadd.f32 %v366, %v372
        %v376 = vmax.f32 %v374, 0.0
        %v377 = vmax.f32 %v375, 0.0
        %378 = vst [vmem:[%s177] sm:$0xff] %v376
        %379 = vst [vmem:[%s177 + $0x8] sm:$0xff] %v377
        %s380 = sand.u32 %s107, 1
        %s381 = scalar_lea.sflag [#allocation3], %s380
        %s382 = sand.u32 %s107, 1
        %s383 = smul.addr %s382, 16
        %s384 = scalar_lea.vmem [#allocation2], %s383
        // Predicated region
        $region33: #{tpu_custom_call.1} parent=31 // pred_check
          %p385 = pneg %p117
        $region34: #{tpu_custom_call.1} parent=31 // pred_check_branch
          %387 = sbr.rel (%p385) target = $region36
        $region35: #{tpu_custom_call.1} parent=31 // pred_region
          %s388 = smul.u32 2, %s22
          %s390 = ssub.s32 256, 256
          %391 = vsyncadd %s381, %s390
          %s392 = smul.addr %s21, 2
          %s393 = sadd.s32 %s388, %s392
          %s394 = smul.addr %s393, 128
          %s395 = scalar_lea.hbm %s3, %s394
          %s396 = sshll.u32 %s384, 4
          %s397 = int_to_ptr.vmem [resolvable:$true] %s396
          %402 = dma.vmem_to_hbm [thread:$0]  %s397, 256, %s395, %s381, 128, 128, 8
        $region36: #{tpu_custom_call.1} parent=31 // pred_fallthru
          _
      $region32: #{tpu_custom_call.1} parent=5 // pred_fallthru
        _
      %p403 = scmp.le.s32.totalorder 2, %s12
      // Predicated region
      $region37: #{tpu_custom_call.1} parent=5 // pred_check
        %p404 = pneg %p403
      $region38: #{tpu_custom_call.1} parent=5 // pred_check_branch
        %406 = sbr.rel (%p404) target = $region40
      $region39: #{tpu_custom_call.1} parent=5 // pred_region
        %s407 = ssub.s32 %s12, 2
        // Predicated region
        $region41: #{tpu_custom_call.1} parent=39 // pred_check
          %p408 = pneg %p123
        $region42: #{tpu_custom_call.1} parent=39 // pred_check_branch
          %410 = sbr.rel (%p408) target = $region44
        $region43: #{tpu_custom_call.1} parent=39 // pred_region
          %s411 = sand.u32 %s108, 1
          %s412 = scalar_lea.sflag [#allocation3], %s411
          %s413 = sand.u32 %s108, 1
          %s414 = smul.addr %s413, 16
          %s415 = scalar_lea.vmem [#allocation2], %s414
          %416 = dma.done %s412, 256
        $region44: #{tpu_custom_call.1} parent=39 // pred_fallthru
          _
      $region40: #{tpu_custom_call.1} parent=5 // pred_fallthru
        _
    $region6: #{tpu_custom_call.1} parent=1 // loop_footer
      %s16 = sadd.s32 1, %s12
    $region7: #{tpu_custom_call.1} parent=1 // loop_footer_branch
      %11 = sbr.rel target = $region3
    $region8: #{tpu_custom_call.1} parent=1 // loop_exit
      _
    %417 = vsyncpa [#allocation3], 1
    %s418 = scalar_lea.sflag [#allocation3], 1
    %419 = vsyncpa %s418, 1

</llo_original>
